<compile_context>
chip_gen: v7x
topology: tpu7x:2x2x1
jax: 0.10.0
libtpu: 0.0.40
codegen_flags: <defaults>
</compile_context>

<pallas_src>
import jax
import jax.numpy as jnp
from jax.experimental import pallas as pl
from jax.experimental.pallas import tpu as pltpu

_CHUNK_TMP_BYTES = 2 * 1024 * 1024   # cap for each in-kernel f32 chunk temporary


def _make_kernel(ca, ce, approx_recip):
    """Build the kernel with static chunk sizes (ca divides ATTN, ce divides ENC_HS)."""

    def kernel(dec_h_ref, wenc_ref, enc_ref, wdecT_ref, bdec_ref, ew_ref,
               ctx_ref, alpha_ref):
        f32 = jnp.float32
        bb = dec_h_ref.shape[0]
        attn = wenc_ref.shape[1]
        enc_hs = enc_ref.shape[1]
        T = alpha_ref.shape[1]
        n_a = attn // ca
        n_e = enc_hs // ce

        # decoder_linear: Dropout (identity at inference) -> Linear(dec_hs, attn)
        wdh = jnp.dot(dec_h_ref[...].astype(f32), wdecT_ref[...],
                      preferred_element_type=f32) + bdec_ref[...]           # (bb, attn)

        # Energy scores: sum_a ew[a] * tanh(wenc[b,a,t] + wdh[b,a]).
        # Chunked over ATTN (sublane axis) so only a (bb, ca, T) f32 temp is
        # materialized at a time.  Offsets are Python ints -> static slices.
        scores = jnp.zeros((bb, T), f32)
        for a in range(n_a):
            lo = a * ca
            wenc_c = wenc_ref[:, lo:lo + ca, :].astype(f32)                 # (bb, ca, T)
            pre = jnp.tanh(wenc_c + wdh[:, lo:lo + ca, None])
            scores = scores + jnp.sum(pre * ew_ref[lo:lo + ca, :][None, :, :],
                                      axis=1)                               # (bb, T)
        # energy_layer bias is constant over T and cancels in the softmax.

        # softmax over the sequence axis (dim=-1 in the PyTorch module)
        m = jnp.max(scores, axis=-1, keepdims=True)
        e = jnp.exp(scores - m)
        inv_denom = pl.reciprocal(jnp.sum(e, axis=-1, keepdims=True),
                                  approx=approx_recip)
        alphas = e * inv_denom                                              # (bb, T)
        alpha_ref[...] = alphas.astype(alpha_ref.dtype)

        # context = bmm(enc_out, alphas^T).squeeze(2): chunked over ENC_HS so
        # only a (bb, ce, T) f32 temp is live at a time.  Kept on VPU/XLU.
        for c in range(n_e):
            lo = c * ce
            enc_c = enc_ref[:, lo:lo + ce, :].astype(f32)                   # (bb, ce, T)
            ctx_ref[:, lo:lo + ce] = jnp.sum(
                enc_c * alphas[:, None, :], axis=-1).astype(ctx_ref.dtype)

    return kernel


def _vmem_budget_and_limit():
    """Generation-aware per-step VMEM budget and scoped vmem limit."""
    try:
        cap = int(pltpu.get_tpu_info().vmem_capacity_bytes)
    except Exception:  # not on a TPU / API unavailable: assume 128 MiB class
        cap = 128 * 1024 * 1024
    if cap <= 64 * 1024 * 1024:
        # v7x-class core: only 64 MiB physical VMEM -> keep the working set tight.
        return 10 * 1024 * 1024, 48 * 1024 * 1024
    # v5e / v6e: 128 MiB physical.  v5e's default scoped limit is only 16 MiB,
    # so the explicit vmem_limit_bytes below matters there too.
    return 24 * 1024 * 1024, 64 * 1024 * 1024


def _pick_chunk(dim, bb, T, tmp_cap_bytes=_CHUNK_TMP_BYTES, max_chunks=16):
    """Chunk length along a reduced channel axis: divides `dim`, keeps the
    per-chunk (bb, chunk, T) f32 temporary under tmp_cap_bytes, and bounds the
    number of statically-unrolled chunks."""
    target = max(1, tmp_cap_bytes // (4 * max(bb, 1) * max(T, 1)))
    target = max(target, -(-dim // max_chunks))
    if target >= dim:
        return dim
    divisors = [d for d in range(1, dim + 1) if dim % d == 0 and d <= target]
    mult8 = [d for d in divisors if d % 8 == 0]
    return max(mult8) if mult8 else max(divisors)


def _pick_batch_tile(B, dec_hs, attn, enc_hs, T, itemsizes, budget):
    """Largest batch tile whose double-buffered footprint + temporaries fits."""
    if B <= 8:
        return B  # block second-minor dim must be 8-aligned or the full extent
    dec_sz, wenc_sz, enc_sz = itemsizes
    # Per-row: double-buffered inputs + outputs, plus f32 row-sized values
    # (wdh row + scores/e/alphas rows).
    row = (2 * (dec_sz * dec_hs + wenc_sz * attn * T + enc_sz * enc_hs * T)
           + 2 * 4 * (enc_hs + T)
           + 4 * (attn + 4 * T))
    # Fixed: double-buffered params + two chunk-capped f32 temporaries.
    fixed = 2 * 4 * (dec_hs * attn + 2 * attn) + 2 * _CHUNK_TMP_BYTES
    avail = max(budget - fixed, 0)
    bb = (avail // row) // 8 * 8
    bb = max(8, min(bb, 1024))
    bb = min(bb, -(-B // 8) * 8)
    # v7x has 2 TensorCores per chip: keep >= 2 steps on the "parallel" batch
    # axis so the second core is not idle (negligible cost on v5e/v6e).
    if -(-B // bb) < 2:
        half = -(-B // 2)
        bb = max(8, min(bb, -(-half // 8) * 8))
    return bb


def bahdanau_attention(dec_h, weighted_enc_out, enc_out, params,
                       approx_softmax_reciprocal=False):
    B, dec_hs = dec_h.shape
    _, attn, T = weighted_enc_out.shape
    enc_hs = enc_out.shape[1]

    # Tiny parameter plumbing only; big tensors go through untouched.
    wdecT = params["w_dec"].T.astype(jnp.float32)               # (DEC_HS, ATTN)
    bdec = params["b_dec"].reshape(1, attn).astype(jnp.float32)
    ew = params["energy_w"].reshape(attn, 1).astype(jnp.float32)
    # params["energy_b"] cancels in the softmax; intentionally not passed.

    budget, vmem_limit = _vmem_budget_and_limit()
    itemsizes = (dec_h.dtype.itemsize,
                 weighted_enc_out.dtype.itemsize,
                 enc_out.dtype.itemsize)
    bb = _pick_batch_tile(B, dec_hs, attn, enc_hs, T, itemsizes, budget)
    num_tiles = pl.cdiv(B, bb)

    ca = _pick_chunk(attn, bb, T)
    ce = _pick_chunk(enc_hs, bb, T)
    kernel = _make_kernel(ca, ce, approx_softmax_reciprocal)

    in_bytes = (B * dec_hs * itemsizes[0]
                + B * attn * T * itemsizes[1]
                + B * enc_hs * T * itemsizes[2]
                + 4 * (dec_hs * attn + 2 * attn))
    out_bytes = 4 * (B * enc_hs + B * T)
    cost = pl.CostEstimate(
        flops=int(B * (2 * dec_hs * attn + attn
                       + 3 * attn * T + 4 * T + 2 * enc_hs * T)),
        transcendentals=int(B * (attn * T + T)),
        bytes_accessed=int(in_bytes + out_bytes),
    )

    ctx, alphas = pl.pallas_call(
        kernel,
        out_shape=(jax.ShapeDtypeStruct((B, enc_hs), jnp.float32),
                   jax.ShapeDtypeStruct((B, T), jnp.float32)),
        grid_spec=pltpu.PrefetchScalarGridSpec(
            num_scalar_prefetch=0,
            grid=(num_tiles,),
            in_specs=[
                pl.BlockSpec((bb, dec_hs), lambda i: (i, 0)),        # dec_h
                pl.BlockSpec((bb, attn, T), lambda i: (i, 0, 0)),    # weighted_enc_out
                pl.BlockSpec((bb, enc_hs, T), lambda i: (i, 0, 0)),  # enc_out
                pl.BlockSpec((dec_hs, attn), lambda i: (0, 0)),      # W_dec^T
                pl.BlockSpec((1, attn), lambda i: (0, 0)),           # b_dec
                pl.BlockSpec((attn, 1), lambda i: (0, 0)),           # energy weight
            ],
            out_specs=(pl.BlockSpec((bb, enc_hs), lambda i: (i, 0)),
                       pl.BlockSpec((bb, T), lambda i: (i, 0))),
        ),
        compiler_params=pltpu.CompilerParams(
            dimension_semantics=("parallel",),
            vmem_limit_bytes=int(vmem_limit),
        ),
        cost_estimate=cost,
    )(dec_h, weighted_enc_out, enc_out, wdecT, bdec, ew)

    return ctx, alphas


if __name__ == "__main__":
    # Small shapes consistent with the module's forward semantics.
    B, T = 2, 16
    ENC_HS, DEC_HS, ATTN = 32, 48, 64

    key = jax.random.PRNGKey(0)
    ks = jax.random.split(key, 7)

    dec_h = jax.random.normal(ks[0], (B, DEC_HS), jnp.float32)
    weighted_enc_out = jax.random.normal(ks[1], (B, ATTN, T), jnp.float32)
    enc_out = jax.random.normal(ks[2], (B, ENC_HS, T), jnp.float32)

    params = {
        # nn.Linear(DEC_HS, ATTN): weight (ATTN, DEC_HS), bias (ATTN,)
        "w_dec": 0.05 * jax.random.normal(ks[3], (ATTN, DEC_HS), jnp.float32),
        "b_dec": 0.05 * jax.random.normal(ks[4], (ATTN,), jnp.float32),
        # nn.Conv1d(ATTN, 1, 1): weight (1, ATTN, 1) -> (ATTN,), bias (1,)
        "energy_w": 0.05 * jax.random.normal(ks[5], (ATTN,), jnp.float32),
        "energy_b": 0.05 * jax.random.normal(ks[6], (1,), jnp.float32),
    }

    ctx, alphas = jax.block_until_ready(
        bahdanau_attention(dec_h, weighted_enc_out, enc_out, params))

    # Pure-JAX reference of the PyTorch forward for a correctness check.
    wdh_ref = dec_h @ params["w_dec"].T + params["b_dec"]                     # (B, ATTN)
    pre_ref = jnp.tanh(weighted_enc_out + wdh_ref[:, :, None])                # (B, ATTN, T)
    scores_ref = jnp.einsum("a,bat->bt", params["energy_w"], pre_ref) + params["energy_b"][0]
    alphas_ref = jax.nn.softmax(scores_ref, axis=-1)                          # (B, T)
    ctx_ref = jnp.einsum("bet,bt->be", enc_out, alphas_ref)                   # (B, ENC_HS)

    assert ctx.shape == (B, ENC_HS) and alphas.shape == (B, T)
    assert jnp.allclose(alphas, alphas_ref, atol=1e-5, rtol=1e-5)
    assert jnp.allclose(ctx, ctx_ref, atol=1e-5, rtol=1e-5)

    print("KERNEL_OK")
</pallas_src>

<mosaic_0001>
module attributes {stable_mosaic.version = 11 : i64} {
  func.func @kernel(%arg0: i32, %arg1: memref<2x48xf32, #tpu.memory_space<vmem>>, %arg2: memref<2x64x16xf32, #tpu.memory_space<vmem>>, %arg3: memref<2x32x16xf32, #tpu.memory_space<vmem>>, %arg4: memref<48x64xf32, #tpu.memory_space<vmem>>, %arg5: memref<1x64xf32, #tpu.memory_space<vmem>>, %arg6: memref<64x1xf32, #tpu.memory_space<vmem>>, %arg7: memref<2x32xf32, #tpu.memory_space<vmem>>, %arg8: memref<2x16xf32, #tpu.memory_space<vmem>>) attributes {dimension_semantics = [#tpu.dimension_semantics<parallel>], iteration_bounds = array<i64: 1>, scalar_prefetch = 0 : i64, scratch_operands = 0 : i64, tpu.core_type = #tpu.core_type<tc>, window_params = [{transform_indices = @transform_0, window_bounds = array<i64: 2, 48>}, {transform_indices = @transform_1, window_bounds = array<i64: 2, 64, 16>}, {transform_indices = @transform_2, window_bounds = array<i64: 2, 32, 16>}, {pipeline_mode = #tpu.pipeline_mode<synchronous>, transform_indices = @transform_3, window_bounds = array<i64: 48, 64>}, {pipeline_mode = #tpu.pipeline_mode<synchronous>, transform_indices = @transform_4, window_bounds = array<i64: 1, 64>}, {pipeline_mode = #tpu.pipeline_mode<synchronous>, transform_indices = @transform_5, window_bounds = array<i64: 64, 1>}, {transform_indices = @transform_6, window_bounds = array<i64: 2, 32>}, {transform_indices = @transform_7, window_bounds = array<i64: 2, 16>}]} {
    %c0 = arith.constant 0 : index
    %c0_0 = arith.constant 0 : index
    %0 = vector.load %arg1[%c0, %c0_0] : memref<2x48xf32, #tpu.memory_space<vmem>>, vector<2x48xf32>
    %c0_1 = arith.constant 0 : index
    %c0_2 = arith.constant 0 : index
    %1 = vector.load %arg4[%c0_1, %c0_2] : memref<48x64xf32, #tpu.memory_space<vmem>>, vector<48x64xf32>
    %cst = arith.constant dense<0.000000e+00> : vector<2x64xf32>
    %2 = tpu.matmul %0, %1, %cst {dimension_numbers = #tpu.dot_dimension_numbers<[1], [0], [0], [1], [0, 0, 1, 1], [], []>} : vector<2x48xf32>, vector<48x64xf32>, vector<2x64xf32> -> vector<2x64xf32>
    %c0_3 = arith.constant 0 : index
    %c0_4 = arith.constant 0 : index
    %3 = vector.load %arg5[%c0_3, %c0_4] : memref<1x64xf32, #tpu.memory_space<vmem>>, vector<1x64xf32>
    %4 = vector.broadcast %3 : vector<1x64xf32> to vector<2x64xf32>
    %5 = arith.addf %2, %4 : vector<2x64xf32>
    %cst_5 = arith.constant 0.000000e+00 : f32
    %6 = vector.broadcast %cst_5 : f32 to vector<2x16xf32>
    %c0_6 = arith.constant 0 : index
    %c0_7 = arith.constant 0 : index
    %c0_8 = arith.constant 0 : index
    %7 = vector.load %arg2[%c0_6, %c0_7, %c0_8] : memref<2x64x16xf32, #tpu.memory_space<vmem>>, vector<2x64x16xf32>
    %8 = vector.shape_cast %5 : vector<2x64xf32> to vector<2x64x1xf32>
    %9 = vector.broadcast %8 : vector<2x64x1xf32> to vector<2x64x16xf32>
    %10 = arith.addf %7, %9 : vector<2x64x16xf32>
    %11 = math.tanh %10 : vector<2x64x16xf32>
    %c0_9 = arith.constant 0 : index
    %c0_10 = arith.constant 0 : index
    %12 = vector.load %arg6[%c0_9, %c0_10] : memref<64x1xf32, #tpu.memory_space<vmem>>, vector<64x1xf32>
    %13 = vector.shape_cast %12 : vector<64x1xf32> to vector<1x64x1xf32>
    %14 = vector.broadcast %13 : vector<1x64x1xf32> to vector<2x64x16xf32>
    %15 = arith.mulf %11, %14 : vector<2x64x16xf32>
    %cst_11 = arith.constant dense<0.000000e+00> : vector<2x16xf32>
    %16 = vector.multi_reduction <add>, %15, %cst_11 [1] : vector<2x64x16xf32> to vector<2x16xf32>
    %17 = arith.addf %6, %16 : vector<2x16xf32>
    %cst_12 = arith.constant dense<0xFF800000> : vector<2xf32>
    %18 = vector.multi_reduction <maximumf>, %17, %cst_12 [1] : vector<2x16xf32> to vector<2xf32>
    %19 = vector.shape_cast %18 : vector<2xf32> to vector<2x1xf32>
    %20 = vector.broadcast %19 : vector<2x1xf32> to vector<2x16xf32>
    %21 = arith.subf %17, %20 : vector<2x16xf32>
    %22 = math.exp %21 : vector<2x16xf32>
    %cst_13 = arith.constant dense<0.000000e+00> : vector<2xf32>
    %23 = vector.multi_reduction <add>, %22, %cst_13 [1] : vector<2x16xf32> to vector<2xf32>
    %24 = vector.shape_cast %23 : vector<2xf32> to vector<2x1xf32>
    %25 = tpu.reciprocal %24 : vector<2x1xf32> -> vector<2x1xf32>
    %26 = vector.broadcast %25 : vector<2x1xf32> to vector<2x16xf32>
    %27 = arith.mulf %22, %26 : vector<2x16xf32>
    %c0_14 = arith.constant 0 : index
    %c0_15 = arith.constant 0 : index
    %28 = vector.load %arg8[%c0_14, %c0_15] : memref<2x16xf32, #tpu.memory_space<vmem>>, vector<2x16xf32>
    tpu.vector_store %arg8[%c0_14, %c0_15], %27 {strides = array<i32>} : memref<2x16xf32, #tpu.memory_space<vmem>>, vector<2x16xf32>,
    %c0_16 = arith.constant 0 : index
    %c0_17 = arith.constant 0 : index
    %c0_18 = arith.constant 0 : index
    %29 = vector.load %arg3[%c0_16, %c0_17, %c0_18] : memref<2x32x16xf32, #tpu.memory_space<vmem>>, vector<2x32x16xf32>
    %30 = vector.shape_cast %27 : vector<2x16xf32> to vector<2x1x16xf32>
    %31 = vector.broadcast %30 : vector<2x1x16xf32> to vector<2x32x16xf32>
    %32 = arith.mulf %29, %31 : vector<2x32x16xf32>
    %cst_19 = arith.constant dense<0.000000e+00> : vector<2x32xf32>
    %33 = vector.multi_reduction <add>, %32, %cst_19 [2] : vector<2x32x16xf32> to vector<2x32xf32>
    %c0_20 = arith.constant 0 : index
    %c0_21 = arith.constant 0 : index
    %34 = vector.load %arg7[%c0_20, %c0_21] : memref<2x32xf32, #tpu.memory_space<vmem>>, vector<2x32xf32>
    tpu.vector_store %arg7[%c0_20, %c0_21], %33 {strides = array<i32>} : memref<2x32xf32, #tpu.memory_space<vmem>>, vector<2x32xf32>,
    return
  }
  func.func @transform_0(%arg0: i32) -> (i32, i32) {
    %c0_i32 = arith.constant 0 : i32
    %c0_i32_0 = arith.constant 0 : i32
    return %arg0, %c0_i32 : i32, i32
  }
  func.func @transform_1(%arg0: i32) -> (i32, i32, i32) {
    %c0_i32 = arith.constant 0 : i32
    %c0_i32_0 = arith.constant 0 : i32
    %c0_i32_1 = arith.constant 0 : i32
    return %arg0, %c0_i32, %c0_i32_0 : i32, i32, i32
  }
  func.func @transform_2(%arg0: i32) -> (i32, i32, i32) {
    %c0_i32 = arith.constant 0 : i32
    %c0_i32_0 = arith.constant 0 : i32
    %c0_i32_1 = arith.constant 0 : i32
    return %arg0, %c0_i32, %c0_i32_0 : i32, i32, i32
  }
  func.func @transform_3(%arg0: i32) -> (i32, i32) {
    %c0_i32 = arith.constant 0 : i32
    %c0_i32_0 = arith.constant 0 : i32
    %c0_i32_1 = arith.constant 0 : i32
    return %c0_i32, %c0_i32_0 : i32, i32
  }
  func.func @transform_4(%arg0: i32) -> (i32, i32) {
    %c0_i32 = arith.constant 0 : i32
    %c0_i32_0 = arith.constant 0 : i32
    %c0_i32_1 = arith.constant 0 : i32
    return %c0_i32, %c0_i32_0 : i32, i32
  }
  func.func @transform_5(%arg0: i32) -> (i32, i32) {
    %c0_i32 = arith.constant 0 : i32
    %c0_i32_0 = arith.constant 0 : i32
    %c0_i32_1 = arith.constant 0 : i32
    return %c0_i32, %c0_i32_0 : i32, i32
  }
  func.func @transform_6(%arg0: i32) -> (i32, i32) {
    %c0_i32 = arith.constant 0 : i32
    %c0_i32_0 = arith.constant 0 : i32
    return %arg0, %c0_i32 : i32, i32
  }
  func.func @transform_7(%arg0: i32) -> (i32, i32) {
    %c0_i32 = arith.constant 0 : i32
    %c0_i32_0 = arith.constant 0 : i32
    return %arg0, %c0_i32 : i32, i32
  }
}

</mosaic_0001>

<llo_original>
// kernel: tpu_custom_call.1
$region0: #{tpu_custom_call.1}
  #allocation0 [shape = 'u32[]', space=smem, size = 0x4, offset = 0x4, fixed_abs, tag = 'smem constant byte address 0x4 - core index']
  #allocation1 [shape = 'u32[144,128]{1,0:T(1,128)}', space=vmem, size = 0x12000, scoped, tag = 'internal scratch']
  %s0 = inlined_call_operand.hbm [shape: f32[2,48], index: 0, kind: input, shape index: {}]
  %s1 = inlined_call_operand.hbm [shape: f32[2,64,16], index: 1, kind: input, shape index: {}]
  %s2 = inlined_call_operand.hbm [shape: f32[2,32,16], index: 2, kind: input, shape index: {}]
  %s3 = inlined_call_operand.hbm [shape: f32[48,64], index: 3, kind: input, shape index: {}]
  %s4 = inlined_call_operand.hbm [shape: f32[1,64], index: 4, kind: input, shape index: {}]
  %s5 = inlined_call_operand.hbm [shape: f32[64,1], index: 5, kind: input, shape index: {}]
  %s6 = inlined_call_operand.hbm [shape: f32[2,32], index: 6, kind: output, shape index: {0}]
  %s7 = inlined_call_operand.hbm [shape: f32[2,16], index: 7, kind: output, shape index: {1}]
  %8 = xla_tuple %s6, %s7
  %s9 = sld [smem:[#allocation0]]
  $region66: #{tpu_custom_call.1} parent=0
    _
  %s11 = ssub.s32 1, %s9
  %s12 = scalar_select 0, %s11, %s9
  $region1: #{tpu_custom_call.1} parent=0
    #allocation2 [shape = 'u8[1024]{0}', space=vmem, size = 0x400, scoped, tag = 'input window, operand 0, single buffered']
    #allocation3 [shape = 's32[1]{0}', space=sflag, size = 0x4, scoped, tag = 'scoped memory for tpu_custom_call.1']
    #allocation4 [shape = 's32[1]{0}', space=sflag, size = 0x4, scoped, tag = 'scoped memory for tpu_custom_call.1']
    #allocation5 [shape = 'u8[65536]{0}', space=vmem, size = 0x10000, scoped, tag = 'input window, operand 1, single buffered']
    #allocation6 [shape = 's32[1]{0}', space=sflag, size = 0x4, scoped, tag = 'scoped memory for tpu_custom_call.1']
    #allocation7 [shape = 'u8[32768]{0}', space=vmem, size = 0x8000, scoped, tag = 'input window, operand 2, single buffered']
    #allocation8 [shape = 'u8[24576]{0}', space=vmem, size = 0x6000, scoped, tag = 'input window, operand 3, single buffered']
    #allocation9 [shape = 's32[1]{0}', space=sflag, size = 0x4, scoped, tag = 'scoped memory for tpu_custom_call.1']
    #allocation10 [shape = 'u8[512]{0}', space=vmem, size = 0x400, scoped, tag = 'input window, operand 4, single buffered']
    #allocation11 [shape = 'u8[32768]{0}', space=vmem, size = 0x8000, scoped, tag = 'input window, operand 5, single buffered']
    #allocation12 [shape = 's32[1]{0}', space=sflag, size = 0x4, scoped, tag = 'scoped memory for tpu_custom_call.1']
    #allocation13 [shape = 'u8[1024]{0}', space=vmem, size = 0x400, scoped, tag = 'output window, operand 0, single buffered']
    #allocation14 [shape = 'u8[1024]{0}', space=vmem, size = 0x400, scoped, tag = 'output window, operand 1, single buffered']
    #allocation15 [shape = 's32[1]{0}', space=sflag, size = 0x4, scoped, tag = 'scoped memory for tpu_custom_call.1']
    %13 = vsyncpa [#allocation3], 0
    %14 = vsyncpa [#allocation6], 0
    %15 = vsyncpa [#allocation9], 0
    %16 = vsyncpa [#allocation12], 0
    %17 = vsyncpa [#allocation4], 0
    %18 = vsyncpa [#allocation15], 0
    // Predicated region
    $region2: #{tpu_custom_call.1} parent=1 // pred_check
      _
    $region3: #{tpu_custom_call.1} parent=1 // pred_check_branch
      %20 = sbr.rel (0) target = $region5
    $region4: #{tpu_custom_call.1} parent=1 // pred_region
      %s22 = ssub.s32 32, 32
      %23 = vsyncadd [#allocation3], %s22
      %s25 = sshll.u32 [#allocation2], 4
      %s26 = int_to_ptr.vmem [resolvable:$true] %s25
      %28 = dma.hbm_to_vmem [thread:$0]  %s0, 32, %s26, [#allocation3]
    $region5: #{tpu_custom_call.1} parent=1 // pred_fallthru
      _
    // Predicated region
    $region6: #{tpu_custom_call.1} parent=1 // pred_check
      _
    $region7: #{tpu_custom_call.1} parent=1 // pred_check_branch
      %30 = sbr.rel (0) target = $region9
    $region8: #{tpu_custom_call.1} parent=1 // pred_region
      %s32 = ssub.s32 2048, 2048
      %33 = vsyncadd [#allocation6], %s32
      %s34 = sshll.u32 [#allocation5], 4
      %s35 = int_to_ptr.vmem [resolvable:$true] %s34
      %40 = dma.hbm_to_vmem [thread:$0]  %s1, 2048, %s35, [#allocation6], 128, 128, 8
    $region9: #{tpu_custom_call.1} parent=1 // pred_fallthru
      _
    // Predicated region
    $region10: #{tpu_custom_call.1} parent=1 // pred_check
      _
    $region11: #{tpu_custom_call.1} parent=1 // pred_check_branch
      %42 = sbr.rel (0) target = $region13
    $region12: #{tpu_custom_call.1} parent=1 // pred_region
      %s44 = ssub.s32 1024, 1024
      %45 = vsyncadd [#allocation6], %s44
      %s46 = sshll.u32 [#allocation7], 4
      %s47 = int_to_ptr.vmem [resolvable:$true] %s46
      %52 = dma.hbm_to_vmem [thread:$0]  %s2, 1024, %s47, [#allocation6], 128, 128, 8
    $region13: #{tpu_custom_call.1} parent=1 // pred_fallthru
      _
    // Predicated region
    $region14: #{tpu_custom_call.1} parent=1 // pred_check
      _
    $region15: #{tpu_custom_call.1} parent=1 // pred_check_branch
      %54 = sbr.rel (0) target = $region17
    $region16: #{tpu_custom_call.1} parent=1 // pred_region
      %s56 = ssub.s32 768, 768
      %57 = vsyncadd [#allocation9], %s56
      %s58 = sshll.u32 [#allocation8], 4
      %s59 = int_to_ptr.vmem [resolvable:$true] %s58
      %64 = dma.hbm_to_vmem [thread:$0]  %s3, 768, %s59, [#allocation9], 128, 128, 8
    $region17: #{tpu_custom_call.1} parent=1 // pred_fallthru
      _
    // Predicated region
    $region18: #{tpu_custom_call.1} parent=1 // pred_check
      _
    $region19: #{tpu_custom_call.1} parent=1 // pred_check_branch
      %66 = sbr.rel (0) target = $region21
    $region20: #{tpu_custom_call.1} parent=1 // pred_region
      %s68 = ssub.s32 16, 16
      %69 = vsyncadd [#allocation9], %s68
      %s71 = sshll.u32 [#allocation10], 4
      %s72 = int_to_ptr.vmem [resolvable:$true] %s71
      %74 = dma.hbm_to_vmem [thread:$0]  %s4, 16, %s72, [#allocation9]
    $region21: #{tpu_custom_call.1} parent=1 // pred_fallthru
      _
    // Predicated region
    $region22: #{tpu_custom_call.1} parent=1 // pred_check
      _
    $region23: #{tpu_custom_call.1} parent=1 // pred_check_branch
      %76 = sbr.rel (0) target = $region25
    $region24: #{tpu_custom_call.1} parent=1 // pred_region
      %s78 = ssub.s32 1024, 1024
      %79 = vsyncadd [#allocation12], %s78
      %s80 = sshll.u32 [#allocation11], 4
      %s81 = int_to_ptr.vmem [resolvable:$true] %s80
      %86 = dma.hbm_to_vmem [thread:$0]  %s5, 1024, %s81, [#allocation12], 128, 128, 8
    $region25: #{tpu_custom_call.1} parent=1 // pred_fallthru
      _
    // Predicated region
    $region26: #{tpu_custom_call.1} parent=1 // pred_check
      _
    $region27: #{tpu_custom_call.1} parent=1 // pred_check_branch
      %88 = sbr.rel (0) target = $region29
    $region28: #{tpu_custom_call.1} parent=1 // pred_region
      %89 = dma.done [#allocation3], 32
    $region29: #{tpu_custom_call.1} parent=1 // pred_fallthru
      _
    // Predicated region
    $region30: #{tpu_custom_call.1} parent=1 // pred_check
      _
    $region31: #{tpu_custom_call.1} parent=1 // pred_check_branch
      %91 = sbr.rel (0) target = $region33
    $region32: #{tpu_custom_call.1} parent=1 // pred_region
      %92 = dma.done [#allocation6], 2048
    $region33: #{tpu_custom_call.1} parent=1 // pred_fallthru
      _
    // Predicated region
    $region34: #{tpu_custom_call.1} parent=1 // pred_check
      _
    $region35: #{tpu_custom_call.1} parent=1 // pred_check_branch
      %94 = sbr.rel (0) target = $region37
    $region36: #{tpu_custom_call.1} parent=1 // pred_region
      %95 = dma.done [#allocation6], 1024
    $region37: #{tpu_custom_call.1} parent=1 // pred_fallthru
      _
    // Predicated region
    $region38: #{tpu_custom_call.1} parent=1 // pred_check
      _
    $region39: #{tpu_custom_call.1} parent=1 // pred_check_branch
      %97 = sbr.rel (0) target = $region41
    $region40: #{tpu_custom_call.1} parent=1 // pred_region
      %98 = dma.done [#allocation9], 768
    $region41: #{tpu_custom_call.1} parent=1 // pred_fallthru
      _
    // Predicated region
    $region42: #{tpu_custom_call.1} parent=1 // pred_check
      _
    $region43: #{tpu_custom_call.1} parent=1 // pred_check_branch
      %100 = sbr.rel (0) target = $region45
    $region44: #{tpu_custom_call.1} parent=1 // pred_region
      %101 = dma.done [#allocation9], 16
    $region45: #{tpu_custom_call.1} parent=1 // pred_fallthru
      _
    // Predicated region
    $region46: #{tpu_custom_call.1} parent=1 // pred_check
      _
    $region47: #{tpu_custom_call.1} parent=1 // pred_check_branch
      %103 = sbr.rel (0) target = $region49
    $region48: #{tpu_custom_call.1} parent=1 // pred_region
      %104 = dma.done [#allocation12], 1024
    $region49: #{tpu_custom_call.1} parent=1 // pred_fallthru
      _
    %v105 = vld [vmem:[#allocation2] sm:$0x3]
    %v106 = vld [vmem:[#allocation8] sm:$0xff]
    %v107 = vld [vmem:[#allocation8 + $0x8] sm:$0xff]
    %v108 = vld [vmem:[#allocation8 + $0x10] sm:$0xff]
    %v109 = vld [vmem:[#allocation8 + $0x18] sm:$0xff]
    %v110 = vld [vmem:[#allocation8 + $0x20] sm:$0xff]
    %v111 = vld [vmem:[#allocation8 + $0x28] sm:$0xff]
    %v112 = vld [vmem:[#allocation10] sm:$0x1]
    %v114 = vlaneseq
    %v115 = vshrl.u32 %v114, 7
    %v116 = vsub.s32 0, %v115
    %v117 = vrot.slane %v112, %v116
    %vm119 = vcmask 392192
    %v121 = vsel %vm119, %v105, 0
    %123 = vmatprep.subr.mxu0 0.0
    %124 = vmatpush1.msra.mxu0 %v106
    %125 = vmatprep.subr.mxu0 0.0
    %126 = vmatpush1.msra.mxu0 %v107
    %127 = vmatprep.subr.mxu0 0.0
    %128 = vmatpush1.msra.mxu0 %v108
    %129 = vmatprep.subr.mxu0 0.0
    %130 = vmatpush1.msra.mxu0 %v109
    %131 = vmatprep.subr.mxu0 0.0
    %132 = vmatpush1.msra.mxu0 %v110
    %133 = vmatprep.subr.mxu0 0.0
    %134 = vmatpush1.msra.mxu0 %v111
    %135 = vmatprep.subr.mxu0 0.0
    %136 = vmatpush1.msra.mxu0 0.0
    %137 = vmatprep.subr.mxu0 0.0
    %138 = vmatpush1.msra.mxu0 0.0
    %139 = vmatprep.subr.mxu0 0.0
    %140 = vmatpush1.msra.mxu0 0.0
    %141 = vmatprep.subr.mxu0 0.0
    %142 = vmatpush1.msra.mxu0 0.0
    %143 = vmatprep.subr.mxu0 0.0
    %144 = vmatpush1.msra.mxu0 0.0
    %145 = vmatprep.subr.mxu0 0.0
    %146 = vmatpush1.msra.mxu0 0.0
    %147 = vmatprep.subr.mxu0 0.0
    %148 = vmatpush1.msra.mxu0 0.0
    %149 = vmatprep.subr.mxu0 0.0
    %150 = vmatpush1.msra.mxu0 0.0
    %151 = vmatprep.subr.mxu0 0.0
    %152 = vmatpush1.msra.mxu0 0.0
    %153 = vmatprep.subr.mxu0 0.0
    %154 = vmatpush1.msra.mxu0 0.0
    %155 = vmatprep.subr.mxu0 0.0
    %156 = vmatpush1.msra.mxu0 0.0
    %157 = vmatprep.subr.mxu0 0.0
    %158 = vmatpush1.msra.mxu0 0.0
    %159 = vmatprep.subr.mxu0 0.0
    %160 = vmatpush1.msra.mxu0 0.0
    %161 = vmatprep.subr.mxu0 0.0
    %162 = vmatpush1.msra.mxu0 0.0
    %163 = vmatprep.subr.mxu0 0.0
    %164 = vmatpush1.msra.mxu0 0.0
    %165 = vmatprep.subr.mxu0 0.0
    %166 = vmatpush1.msra.mxu0 0.0
    %167 = vmatprep.subr.mxu0 0.0
    %168 = vmatpush1.msra.mxu0 0.0
    %169 = vmatprep.subr.mxu0 0.0
    %170 = vmatpush1.msra.mxu0 0.0
    %171 = vmatprep.subr.mxu0 0.0
    %172 = vmatpush1.msra.mxu0 0.0
    %173 = vmatprep.subr.mxu0 0.0
    %174 = vmatpush1.msra.mxu0 0.0
    %175 = vmatprep.subr.mxu0 0.0
    %176 = vmatpush1.msra.mxu0 0.0
    %177 = vmatprep.subr.mxu0 0.0
    %178 = vmatpush1.msra.mxu0 0.0
    %179 = vmatprep.subr.mxu0 0.0
    %180 = vmatpush1.msra.mxu0 0.0
    %181 = vmatprep.subr.mxu0 0.0
    %182 = vmatpush1.msra.mxu0 0.0
    %183 = vmatprep.subr.mxu0 0.0
    %184 = vmatpush1.msra.mxu0 0.0
    %185 = vmatprep.subr.mxu0 0.0
    %186 = vmatpush1.msra.mxu0 0.0
    %187 = vmatprep.mubr.f32.mxu0 0.0
    %188 = vmatmul.mubr.f32.gmra.mrb[0].mxu0 %v121
    %v189 = vpop.f32.mrb[0].mxu0
    %v190 = vadd.f32 %v117, %v189
    %v191 = vpop.f32.mrb[0].mxu0
    %192 = vdwg.mxu0
    %v193 = vld [vmem:[#allocation5] sm:$0xff]
    %v194 = vld [vmem:[#allocation5 + $0x8] sm:$0xff]
    %v195 = vld [vmem:[#allocation5 + $0x10] sm:$0xff]
    %v196 = vld [vmem:[#allocation5 + $0x18] sm:$0xff]
    %v197 = vld [vmem:[#allocation5 + $0x20] sm:$0xff]
    %v198 = vld [vmem:[#allocation5 + $0x28] sm:$0xff]
    %v199 = vld [vmem:[#allocation5 + $0x30] sm:$0xff]
    %v200 = vld [vmem:[#allocation5 + $0x38] sm:$0xff]
    %v201 = vld [vmem:[#allocation5 + $0x40] sm:$0xff]
    %v202 = vld [vmem:[#allocation5 + $0x48] sm:$0xff]
    %v203 = vld [vmem:[#allocation5 + $0x50] sm:$0xff]
    %v204 = vld [vmem:[#allocation5 + $0x58] sm:$0xff]
    %v205 = vld [vmem:[#allocation5 + $0x60] sm:$0xff]
    %v206 = vld [vmem:[#allocation5 + $0x68] sm:$0xff]
    %v207 = vld [vmem:[#allocation5 + $0x70] sm:$0xff]
    %v208 = vld [vmem:[#allocation5 + $0x78] sm:$0xff]
    %v209 = vlaneseq
    %v210 = vshrl.u32 %v209, 7
    %v211 = vsub.s32 0, %v210
    %v212 = vrot.slane %v190, %v211
    %214 = vbcast.lane.b32.xlu0 %v212, 256
    %v215 = vpop.permute.xlu0 %214
    %s217 = sor.u32 256, 8
    %218 = vbcast.lane.b32.xlu0 %v212, %s217
    %v219 = vpop.permute.xlu0 %218
    %s221 = sor.u32 256, 16
    %222 = vbcast.lane.b32.xlu0 %v212, %s221
    %v223 = vpop.permute.xlu0 %222
    %s225 = sor.u32 256, 24
    %226 = vbcast.lane.b32.xlu0 %v212, %s225
    %v227 = vpop.permute.xlu0 %226
    %s229 = sor.u32 256, 32
    %230 = vbcast.lane.b32.xlu0 %v212, %s229
    %v231 = vpop.permute.xlu0 %230
    %s233 = sor.u32 256, 40
    %234 = vbcast.lane.b32.xlu0 %v212, %s233
    %v235 = vpop.permute.xlu0 %234
    %s237 = sor.u32 256, 48
    %238 = vbcast.lane.b32.xlu0 %v212, %s237
    %v239 = vpop.permute.xlu0 %238
    %s241 = sor.u32 256, 56
    %242 = vbcast.lane.b32.xlu0 %v212, %s241
    %v243 = vpop.permute.xlu0 %242
    %v244 = vlaneseq
    %v245 = vshrl.u32 %v244, 7
    %v246 = vsub.s32 1, %v245
    %v247 = vrot.slane %v190, %v246
    %249 = vbcast.lane.b32.xlu0 %v247, 256
    %v250 = vpop.permute.xlu0 %249
    %s252 = sor.u32 256, 8
    %253 = vbcast.lane.b32.xlu0 %v247, %s252
    %v254 = vpop.permute.xlu0 %253
    %s256 = sor.u32 256, 16
    %257 = vbcast.lane.b32.xlu0 %v247, %s256
    %v258 = vpop.permute.xlu0 %257
    %s260 = sor.u32 256, 24
    %261 = vbcast.lane.b32.xlu0 %v247, %s260
    %v262 = vpop.permute.xlu0 %261
    %s264 = sor.u32 256, 32
    %265 = vbcast.lane.b32.xlu0 %v247, %s264
    %v266 = vpop.permute.xlu0 %265
    %s268 = sor.u32 256, 40
    %269 = vbcast.lane.b32.xlu0 %v247, %s268
    %v270 = vpop.permute.xlu0 %269
    %s272 = sor.u32 256, 48
    %273 = vbcast.lane.b32.xlu0 %v247, %s272
    %v274 = vpop.permute.xlu0 %273
    %s276 = sor.u32 256, 56
    %277 = vbcast.lane.b32.xlu0 %v247, %s276
    %v278 = vpop.permute.xlu0 %277
    %v279 = vadd.f32 %v193, %v215
    %v280 = vadd.f32 %v194, %v219
    %v281 = vadd.f32 %v195, %v223
    %v282 = vadd.f32 %v196, %v227
    %v283 = vadd.f32 %v197, %v231
    %v284 = vadd.f32 %v198, %v235
    %v285 = vadd.f32 %v199, %v239
    %v286 = vadd.f32 %v200, %v243
    %v287 = vadd.f32 %v201, %v250
    %v288 = vadd.f32 %v202, %v254
    %v289 = vadd.f32 %v203, %v258
    %v290 = vadd.f32 %v204, %v262
    %v291 = vadd.f32 %v205, %v266
    %v292 = vadd.f32 %v206, %v270
    %v293 = vadd.f32 %v207, %v274
    %v294 = vadd.f32 %v208, %v278
    %v295 = vtanh.pop %v279
    %v296 = vtanh.pop %v280
    %v297 = vtanh.pop %v281
    %v298 = vtanh.pop %v282
    %v299 = vtanh.pop %v283
    %v300 = vtanh.pop %v284
    %v301 = vtanh.pop %v285
    %v302 = vtanh.pop %v286
    %v303 = vtanh.pop %v287
    %v304 = vtanh.pop %v288
    %v305 = vtanh.pop %v289
    %v306 = vtanh.pop %v290
    %v307 = vtanh.pop %v291
    %v308 = vtanh.pop %v292
    %v309 = vtanh.pop %v293
    %v310 = vtanh.pop %v294
    %v311 = vld [vmem:[#allocation11] sm:$0xff]
    %v312 = vld [vmem:[#allocation11 + $0x8] sm:$0xff]
    %v313 = vld [vmem:[#allocation11 + $0x10] sm:$0xff]
    %v314 = vld [vmem:[#allocation11 + $0x18] sm:$0xff]
    %v315 = vld [vmem:[#allocation11 + $0x20] sm:$0xff]
    %v316 = vld [vmem:[#allocation11 + $0x28] sm:$0xff]
    %v317 = vld [vmem:[#allocation11 + $0x30] sm:$0xff]
    %v318 = vld [vmem:[#allocation11 + $0x38] sm:$0xff]
    %320 = vset.pattern.permute.xlu0 0
    %321 = vperm.xlu0 %320, %v311
    %v322 = vpop.permute.xlu0 %321
    %325 = vset.pattern.permute.xlu0 0
    %326 = vperm.xlu0 %325, %v312
    %v327 = vpop.permute.xlu0 %326
    %330 = vset.pattern.permute.xlu0 0
    %331 = vperm.xlu0 %330, %v313
    %v332 = vpop.permute.xlu0 %331
    %335 = vset.pattern.permute.xlu0 0
    %336 = vperm.xlu0 %335, %v314
    %v337 = vpop.permute.xlu0 %336
    %340 = vset.pattern.permute.xlu0 0
    %341 = vperm.xlu0 %340, %v315
    %v342 = vpop.permute.xlu0 %341
    %345 = vset.pattern.permute.xlu0 0
    %346 = vperm.xlu0 %345, %v316
    %v347 = vpop.permute.xlu0 %346
    %350 = vset.pattern.permute.xlu0 0
    %351 = vperm.xlu0 %350, %v317
    %v352 = vpop.permute.xlu0 %351
    %355 = vset.pattern.permute.xlu0 0
    %356 = vperm.xlu0 %355, %v318
    %v357 = vpop.permute.xlu0 %356
    %v359 = vmul.f32 %v295, %v322
    %v360 = vmul.f32 %v296, %v327
    %v361 = vmul.f32 %v297, %v332
    %v362 = vmul.f32 %v298, %v337
    %v363 = vmul.f32 %v299, %v342
    %v364 = vmul.f32 %v300, %v347
    %v365 = vmul.f32 %v301, %v352
    %v366 = vmul.f32 %v302, %v357
    %v367 = vmul.f32 %v303, %v322
    %v368 = vmul.f32 %v304, %v327
    %v369 = vmul.f32 %v305, %v332
    %v370 = vmul.f32 %v306, %v337
    %v371 = vmul.f32 %v307, %v342
    %v372 = vmul.f32 %v308, %v347
    %v373 = vmul.f32 %v309, %v352
    %v374 = vmul.f32 %v310, %v357
    %vm375 = vcmask 130048
    %v376 = vsel %vm375, %v359, 0.0
    %v377 = vsel %vm375, %v360, 0.0
    %v378 = vadd.f32 %v376, %v377
    %v379 = vsel %vm375, %v361, 0.0
    %v380 = vadd.f32 %v378, %v379
    %v381 = vsel %vm375, %v362, 0.0
    %v382 = vadd.f32 %v380, %v381
    %v383 = vsel %vm375, %v363, 0.0
    %v384 = vadd.f32 %v382, %v383
    %v385 = vsel %vm375, %v364, 0.0
    %v386 = vadd.f32 %v384, %v385
    %v387 = vsel %vm375, %v365, 0.0
    %v388 = vadd.f32 %v386, %v387
    %v389 = vsel %vm375, %v366, 0.0
    %v390 = vadd.f32 %v388, %v389
    %v391 = vrot.slane %v390, 4
    %v392 = vadd.f32 %v390, %v391
    %v393 = vrot.slane %v392, 2
    %v394 = vadd.f32 %v392, %v393
    %v395 = vrot.slane %v394, 1
    %v396 = vadd.f32 %v394, %v395
    %v397 = vsel %vm375, %v367, 0.0
    %v398 = vsel %vm375, %v368, 0.0
    %v399 = vadd.f32 %v397, %v398
    %v400 = vsel %vm375, %v369, 0.0
    %v401 = vadd.f32 %v399, %v400
    %v402 = vsel %vm375, %v370, 0.0
    %v403 = vadd.f32 %v401, %v402
    %v404 = vsel %vm375, %v371, 0.0
    %v405 = vadd.f32 %v403, %v404
    %v406 = vsel %vm375, %v372, 0.0
    %v407 = vadd.f32 %v405, %v406
    %v408 = vsel %vm375, %v373, 0.0
    %v409 = vadd.f32 %v407, %v408
    %v410 = vsel %vm375, %v374, 0.0
    %v411 = vadd.f32 %v409, %v410
    %v412 = vrot.slane %v411, 4
    %v413 = vadd.f32 %v411, %v412
    %v414 = vrot.slane %v413, 2
    %v415 = vadd.f32 %v413, %v414
    %v416 = vrot.slane %v415, 1
    %v417 = vadd.f32 %v415, %v416
    %v418 = vadd.f32 %v396, 0.0
    %v419 = vadd.f32 %v417, 0.0
    %vm422 = vcmask 1041409
    %v423 = vsel %vm422, %v419, %v418
    %vm425 = vcmask 123904
    %v426 = vsel %vm425, %v423, -inf
    %427 = vmax.xlane.f32.xlu0 %v426
    %v428 = vpop.xlane.xlu0 %427
    %v430 = vrot.slane %v428, 1
    %v433 = vsub.f32 %v418, %v428
    %v434 = vsub.f32 %v419, %v430
    %v435 = vmul.f32 %v433, 1.442695
    %v436 = vpow.pop %v435
    %v437 = vmul.f32 %v434, 1.442695
    %v438 = vpow.pop %v437
    %v441 = vrot.slane %v438, 7
    %v442 = vsel %vm422, %v441, %v436
    %v444 = vsel %vm425, %v442, 0.0
    %445 = vadd.xlane.f32.xlu0 %v444
    %v446 = vpop.xlane.xlu0 %445
    %v447 = vrcp.pop %v446
    %v449 = vrot.slane %v447, 1
    %v452 = vmul.f32 %v436, %v447
    %v453 = vmul.f32 %v438, %v449
    %v456 = vrot.slane %v453, 7
    %v457 = vsel %vm422, %v456, %v452
    %459 = vst.msk [vmem:[#allocation14] sm:$0x3] %vm425, %v457
    %v460 = vld [vmem:[#allocation7] sm:$0xff]
    %v461 = vld [vmem:[#allocation7 + $0x8] sm:$0xff]
    %v462 = vld [vmem:[#allocation7 + $0x10] sm:$0xff]
    %v463 = vld [vmem:[#allocation7 + $0x18] sm:$0xff]
    %v464 = vld [vmem:[#allocation7 + $0x20] sm:$0xff]
    %v465 = vld [vmem:[#allocation7 + $0x28] sm:$0xff]
    %v466 = vld [vmem:[#allocation7 + $0x30] sm:$0xff]
    %v467 = vld [vmem:[#allocation7 + $0x38] sm:$0xff]
    %v468 = vlaneseq
    %v469 = vshrl.u32 %v468, 7
    %v470 = vsub.s32 0, %v469
    %v471 = vrot.slane %v452, %v470
    %v472 = vlaneseq
    %v473 = vshrl.u32 %v472, 7
    %v474 = vsub.s32 0, %v473
    %v475 = vrot.slane %v453, %v474
    %v476 = vmul.f32 %v460, %v471
    %v477 = vmul.f32 %v461, %v471
    %v478 = vmul.f32 %v462, %v471
    %v479 = vmul.f32 %v463, %v471
    %v480 = vmul.f32 %v464, %v475
    %v481 = vmul.f32 %v465, %v475
    %v482 = vmul.f32 %v466, %v475
    %v483 = vmul.f32 %v467, %v475
    %v484 = vsel %vm375, %v476, 0.0
    %485 = vadd.xlane.f32.xlu0 %v484
    %v486 = vpop.xlane.xlu0 %485
    %v487 = vsel %vm375, %v477, 0.0
    %488 = vadd.xlane.f32.xlu0 %v487
    %v489 = vpop.xlane.xlu0 %488
    %v490 = vsel %vm375, %v478, 0.0
    %491 = vadd.xlane.f32.xlu0 %v490
    %v492 = vpop.xlane.xlu0 %491
    %v493 = vsel %vm375, %v479, 0.0
    %494 = vadd.xlane.f32.xlu0 %v493
    %v495 = vpop.xlane.xlu0 %494
    %v496 = vsel %vm375, %v480, 0.0
    %497 = vadd.xlane.f32.xlu0 %v496
    %v498 = vpop.xlane.xlu0 %497
    %v499 = vsel %vm375, %v481, 0.0
    %500 = vadd.xlane.f32.xlu0 %v499
    %v501 = vpop.xlane.xlu0 %500
    %v502 = vsel %vm375, %v482, 0.0
    %503 = vadd.xlane.f32.xlu0 %v502
    %v504 = vpop.xlane.xlu0 %503
    %v505 = vsel %vm375, %v483, 0.0
    %506 = vadd.xlane.f32.xlu0 %v505
    %v507 = vpop.xlane.xlu0 %506
    %v516 = vlaneseq
    %v517 = vand.u32 %v516, 127
    %v518 = vlaneseq
    %v519 = vshrl.u32 %v518, 7
    %v520 = vsub.s32 %v517, %v519
    %v521 = vrot.slane %v486, %v520
    %v522 = vadd.s32 %v517, 4294967288
    %v523 = vlaneseq
    %v524 = vshrl.u32 %v523, 7
    %v525 = vsub.s32 %v522, %v524
    %v526 = vrot.slane %v489, %v525
    %vm527 = vcmask 130112
    %v528 = vsel %vm527, %v526, %v521
    %v529 = vadd.s32 %v517, 4294967280
    %v530 = vlaneseq
    %v531 = vshrl.u32 %v530, 7
    %v532 = vsub.s32 %v529, %v531
    %v533 = vrot.slane %v492, %v532
    %vm534 = vcmask 195712
    %v535 = vsel %vm534, %v533, %v528
    %v536 = vadd.s32 %v517, 4294967272
    %v537 = vlaneseq
    %v538 = vshrl.u32 %v537, 7
    %v539 = vsub.s32 %v536, %v538
    %v540 = vrot.slane %v495, %v539
    %vm541 = vcmask 261312
    %v542 = vsel %vm541, %v540, %v535
    %v543 = vlaneseq
    %v544 = vshrl.u32 %v543, 7
    %v545 = vsub.s32 %v517, %v544
    %v546 = vrot.slane %v498, %v545
    %v547 = vlaneseq
    %v548 = vshrl.u32 %v547, 7
    %v549 = vsub.s32 %v522, %v548
    %v550 = vrot.slane %v501, %v549
    %v551 = vsel %vm527, %v550, %v546
    %v552 = vlaneseq
    %v553 = vshrl.u32 %v552, 7
    %v554 = vsub.s32 %v529, %v553
    %v555 = vrot.slane %v504, %v554
    %v556 = vsel %vm534, %v555, %v551
    %v557 = vlaneseq
    %v558 = vshrl.u32 %v557, 7
    %v559 = vsub.s32 %v536, %v558
    %v560 = vrot.slane %v507, %v559
    %v561 = vsel %vm541, %v560, %v556
    %v562 = vsel %vm422, %v561, %v542
    %vm564 = vcmask 254976
    %565 = vst.msk [vmem:[#allocation13] sm:$0x3] %vm564, %v562
    // Predicated region
    $region50: #{tpu_custom_call.1} parent=1 // pred_check
      _
    $region51: #{tpu_custom_call.1} parent=1 // pred_check_branch
      %567 = sbr.rel (0) target = $region53
    $region52: #{tpu_custom_call.1} parent=1 // pred_region
      %s569 = ssub.s32 32, 32
      %570 = vsyncadd [#allocation4], %s569
      %s572 = sshll.u32 [#allocation13], 4
      %s573 = int_to_ptr.vmem [resolvable:$true] %s572
      %575 = dma.vmem_to_hbm [thread:$0]  %s573, 32, %s6, [#allocation4]
    $region53: #{tpu_custom_call.1} parent=1 // pred_fallthru
      _
    // Predicated region
    $region54: #{tpu_custom_call.1} parent=1 // pred_check
      _
    $region55: #{tpu_custom_call.1} parent=1 // pred_check_branch
      %577 = sbr.rel (0) target = $region57
    $region56: #{tpu_custom_call.1} parent=1 // pred_region
      %s579 = ssub.s32 32, 32
      %580 = vsyncadd [#allocation15], %s579
      %s582 = sshll.u32 [#allocation14], 4
      %s583 = int_to_ptr.vmem [resolvable:$true] %s582
      %585 = dma.vmem_to_hbm [thread:$0]  %s583, 32, %s7, [#allocation15]
    $region57: #{tpu_custom_call.1} parent=1 // pred_fallthru
      _
    // Predicated region
    $region58: #{tpu_custom_call.1} parent=1 // pred_check
      _
    $region59: #{tpu_custom_call.1} parent=1 // pred_check_branch
      %587 = sbr.rel (0) target = $region61
    $region60: #{tpu_custom_call.1} parent=1 // pred_region
      %588 = dma.done [#allocation4], 32
    $region61: #{tpu_custom_call.1} parent=1 // pred_fallthru
      _
    // Predicated region
    $region62: #{tpu_custom_call.1} parent=1 // pred_check
      _
    $region63: #{tpu_custom_call.1} parent=1 // pred_check_branch
      %590 = sbr.rel (0) target = $region65
    $region64: #{tpu_custom_call.1} parent=1 // pred_region
      %591 = dma.done [#allocation15], 32
    $region65: #{tpu_custom_call.1} parent=1 // pred_fallthru
      _
    %592 = vsyncpa [#allocation3], 1
    %593 = vsyncpa [#allocation6], 1
    %594 = vsyncpa [#allocation9], 1
    %595 = vsyncpa [#allocation12], 1
    %596 = vsyncpa [#allocation4], 1
    %597 = vsyncpa [#allocation15], 1

</llo_original>
